<compile_context>
chip_gen: v7x
topology: tpu7x:2x2x1
jax: 0.10.0
libtpu: 0.0.40
codegen_flags: <defaults>
</compile_context>

<pallas_src>
import jax
import jax.numpy as jnp
from jax import lax
from jax.experimental import pallas as pl
from jax.experimental.pallas import tpu as pltpu

_SQRT1_2 = 0.7071067811865476
_SCALER = 2.0 - 1e-05
_LANE = 128


def _round_up(x, m):
    return ((x + m - 1) // m) * m


def _erf(x):
    # Abramowitz & Stegun 7.1.26 (max abs error 1.5e-7); uses only mul/add/div/exp/
    # abs/select, all of which lower cleanly in Mosaic.
    ax = jnp.abs(x)
    t = 1.0 / (1.0 + 0.3275911 * ax)
    poly = t * (0.254829592 + t * (-0.284496736 + t * (
        1.421413741 + t * (-1.453152027 + t * 1.061405429))))
    y = 1.0 - poly * jnp.exp(-ax * ax)
    return jnp.where(x < 0.0, -y, y)


def ntb_kernel(obs_ref, prev_ref, w1_ref, b1_ref, w2_ref, b2_ref, w3_ref, b3_ref,
               out_ref):
    x = obs_ref[...]                                       # (4, TB) f32, batch on lanes

    # ---- MLP: Linear -> ReLU -> Linear -> ReLU -> Linear(out=2), h = W @ x ----
    h = jnp.dot(w1_ref[...], x, preferred_element_type=jnp.float32) + b1_ref[...]
    h = jnp.maximum(h, 0.0)
    h = jnp.dot(w2_ref[...], h, preferred_element_type=jnp.float32) + b2_ref[...]
    h = jnp.maximum(h, 0.0)
    a = jnp.dot(w3_ref[...], h, preferred_element_type=jnp.float32) + b3_ref[...]  # (2, TB)
    # TODO(synk): only if a bundle dump shows vmatmul cadence binding, cast the
    # resident weights/activations to bf16 (keep preferred_element_type=f32) and move
    # the 2-row layer-3 to the VPU; skipped to keep the 1e-4 tolerance untouched.

    # ---- Black-Scholes call delta folded into tanh space:  z = tanh(delta_unscaled) ----
    moneyness = x[0:1, :]
    expiry    = x[1:2, :]
    vol       = x[2:3, :]
    drift     = x[3:4, :]
    sqrt_t = jnp.sqrt(expiry)
    d1 = (jnp.log(moneyness) + (drift + 0.5 * vol * vol) * expiry) / (vol * sqrt_t)
    # delta*scaler - scaler/2 == 0.5*scaler*erf(d1/sqrt(2))   since delta = Phi(d1)
    z = jnp.float32(0.5 * _SCALER) * _erf(d1 * jnp.float32(_SQRT1_2))   # (1, TB)

    # ---- leaky_relu (slope 0.01) band half-widths; one tanh on the (2, TB) block ----
    lrelu = jnp.where(a >= 0.0, a, 0.01 * a)
    t = jnp.tanh(lrelu)                                    # (2, TB)
    t_lo = t[0:1, :]
    t_hi = t[1:2, :]
    # tanh(atanh(z) -/+ w) == (z -/+ tanh(w)) / (1 -/+ z*tanh(w)) : no arctanh needed.
    # TODO(synk): torch raises ValueError on isinf(delta_unscaled); no in-kernel raise
    # on TPU and the check is moot here (atanh is never materialized, |z| < 1).
    lb = (z - t_lo) / (1.0 - z * t_lo)
    ub = (z + t_hi) / (1.0 + z * t_hi)

    # ---- clamp previous hedge (unscaled to [-1, 1]) into the band, rescale ----
    prev_unscaled = 2.0 * prev_ref[...] - 1.0              # (1, TB)
    act = jnp.minimum(jnp.maximum(prev_unscaled, lb), ub)  # clamp(min>max) -> ub, as torch
    out_ref[...] = (act + 1.0) * 0.5
    # TODO(synk): v7x follow-up if no longer HBM-bound: repack z / t / prev once into a
    # dense (8, TB//8) layout so the transcendental tail and the store use all 8
    # sublanes instead of 1-2 of 8.


def ntb_forward(obs_cm, prev_hedge, params, tile_b=65536):
    """obs_cm: (4, B) f32 channel-major [moneyness, expiry, volatility, drift],
    prev_hedge: (B,) f32  ->  (B,) f32 hedge action in [0, 1].

    Channel-major input avoids an extra full HBM transpose pass before the kernel;
    callers holding the torch-style (B, 4) layout can use ntb_forward_row_major.
    """
    assert obs_cm.shape[0] == 4
    B = int(obs_cm.shape[1])
    obs_cm = jnp.asarray(obs_cm, jnp.float32)
    prev_2d = jnp.reshape(jnp.asarray(prev_hedge, jnp.float32), (1, B))

    # Pre-transpose the tiny MLP params to the h = W @ x layout (batch on lanes).
    w1t = jnp.asarray(params["w1"], jnp.float32).T          # (H1, 4)
    w2t = jnp.asarray(params["w2"], jnp.float32).T          # (H2, H1)
    w3t = jnp.asarray(params["w3"], jnp.float32).T          # (2, H2)
    b1t = jnp.asarray(params["b1"], jnp.float32).reshape(-1, 1)
    b2t = jnp.asarray(params["b2"], jnp.float32).reshape(-1, 1)
    b3t = jnp.asarray(params["b3"], jnp.float32).reshape(-1, 1)
    h1, h2 = w1t.shape[0], w2t.shape[0]

    # Lane-dense batch tile, no host-side padding: grid = cdiv(B, tb); Pallas masks
    # the ragged tail (dead lanes compute garbage, OOB stores are dropped).
    tb = _round_up(max(int(tile_b), _LANE), _LANE)
    tb = min(tb, _round_up(B, _LANE))
    # Megacore (v7x has 2 TensorCores): keep >=2 (ideally >=4) grid steps when the
    # batch is big enough that the ~0.35 us per-step overhead stays amortized.
    for parts in (4, 2):
        part = _round_up(-(-B // parts), _LANE)
        if part >= 32768:
            tb = min(tb, part)
            break
    grid = (pl.cdiv(B, tb),)

    # Double-buffered streamed blocks: (4 obs + 1 prev + 1 out) rows of f32 per lane.
    stream_vmem = 2 * 4 * tb * 6
    cp_kwargs = dict(dimension_semantics=("parallel",))
    if stream_vmem > 12 * 1024 * 1024:
        # v5e's default scoped-VMEM limit is 16 MiB; raise it only for huge tiles.
        cp_kwargs["vmem_limit_bytes"] = int(min(2 * stream_vmem, 48 * 1024 * 1024))

    cost = pl.CostEstimate(
        flops=2 * B * (4 * h1 + h1 * h2 + h2 * 2) + 64 * B,
        transcendentals=8 * B,
        bytes_accessed=B * 6 * 4,
    )

    out = pl.pallas_call(
        ntb_kernel,
        out_shape=jax.ShapeDtypeStruct((1, B), jnp.float32),
        grid=grid,
        in_specs=[
            pl.BlockSpec((4, tb), lambda i: (0, i)),         # obs tile (streamed)
            pl.BlockSpec((1, tb), lambda i: (0, i)),         # prev_hedge tile (streamed)
            # TODO(synk): if xprof shows exposed DMA on the two streams above, add
            # pipeline_mode=pl.Buffered(3) to them (weights stay default/resident).
            pl.BlockSpec((h1, 4), lambda i: (0, 0)),          # weights/biases: resident
            pl.BlockSpec((h1, 1), lambda i: (0, 0)),
            pl.BlockSpec((h2, h1), lambda i: (0, 0)),
            pl.BlockSpec((h2, 1), lambda i: (0, 0)),
            pl.BlockSpec((2, h2), lambda i: (0, 0)),
            pl.BlockSpec((2, 1), lambda i: (0, 0)),
        ],
        out_specs=pl.BlockSpec((1, tb), lambda i: (0, i)),
        compiler_params=pltpu.CompilerParams(**cp_kwargs),
        cost_estimate=cost,
    )(obs_cm, prev_2d, w1t, b1t, w2t, b2t, w3t, b3t)

    # nn.Flatten(0): (1, B) -> (B,) is a free metadata reshape (no padded slice-copy).
    return jnp.reshape(out, (B,))


def ntb_forward_row_major(obs, prev_hedge, params, tile_b=65536):
    """Compatibility path for torch-style (B, 4) obs (pays one extra transpose pass)."""
    return ntb_forward(jnp.asarray(obs, jnp.float32).T, prev_hedge, params, tile_b)


def ntb_reference(obs_cm, prev_hedge, params):
    """Pure-JAX reference of the torch forward (true erf / atanh / tanh path)."""
    x = jnp.asarray(obs_cm, jnp.float32).T                  # (B, 4)
    hi = lax.Precision.HIGHEST
    h = jnp.maximum(jnp.dot(x, params["w1"], precision=hi) + params["b1"], 0.0)
    h = jnp.maximum(jnp.dot(h, params["w2"], precision=hi) + params["b2"], 0.0)
    a = jnp.dot(h, params["w3"], precision=hi) + params["b3"]
    m, t, v, r = x[:, 0], x[:, 1], x[:, 2], x[:, 3]
    d1 = (jnp.log(m) + (r + 0.5 * v * v) * t) / (v * jnp.sqrt(t))
    delta = 0.5 * (1.0 + lax.erf(d1 * jnp.float32(_SQRT1_2)))
    du = jnp.arctanh(delta * _SCALER - _SCALER / 2.0)
    lb = jnp.tanh(du - jax.nn.leaky_relu(a[:, 0], 0.01))
    ub = jnp.tanh(du + jax.nn.leaky_relu(a[:, 1], 0.01))
    pu = 2.0 * jnp.asarray(prev_hedge, jnp.float32) - 1.0
    act = jnp.minimum(jnp.maximum(pu, lb), ub)
    return (act + 1.0) * 0.5


def init_params(key, in_features=4, net_arch=(32, 32), out_features=2):
    """Deterministic MLP parameter init (Linear layers as in create_module)."""
    dims = [in_features, *net_arch, out_features]
    keys = jax.random.split(key, len(dims) - 1)
    params = {}
    for i, (fan_in, fan_out) in enumerate(zip(dims[:-1], dims[1:]), start=1):
        wk, bk = jax.random.split(keys[i - 1])
        bound = 1.0 / jnp.sqrt(jnp.float32(fan_in))
        params[f"w{i}"] = jax.random.uniform(
            wk, (fan_in, fan_out), jnp.float32, -bound, bound)
        params[f"b{i}"] = jax.random.uniform(
            bk, (1, fan_out), jnp.float32, -bound, bound)
    return params


if __name__ == "__main__":
    key = jax.random.PRNGKey(0)
    k_obs, k_prev, k_param = jax.random.split(key, 3)

    params = init_params(k_param, in_features=4, net_arch=(32, 32), out_features=2)

    def make_inputs(k, B):
        ko, kp = jax.random.split(k)
        u = jax.random.uniform(ko, (4, B), jnp.float32)   # channel-major from the start
        moneyness = 0.8 + 0.4 * u[0]                      # ~ [0.8, 1.2]
        expiry    = 0.1 + 0.9 * u[1]                      # ~ [0.1, 1.0]
        vol       = 0.1 + 0.4 * u[2]                      # ~ [0.1, 0.5]
        drift     = -0.05 + 0.15 * u[3]                   # ~ [-0.05, 0.1]
        obs_cm = jnp.stack([moneyness, expiry, vol, drift], axis=0)   # (4, B)
        prev = jax.random.uniform(kp, (B,), jnp.float32)              # (B,) in [0, 1]
        return obs_cm, prev

    # Small batch: single ragged tile (8 valid lanes of a 128-lane block).
    B = 8
    obs_cm, prev = make_inputs(k_obs, B)
    out = ntb_forward(obs_cm, prev, params)
    jax.block_until_ready(out)
    ref = ntb_reference(obs_cm, prev, params)
    assert out.shape == (B,)
    assert bool(jnp.all(jnp.isfinite(out)))
    assert bool(jnp.all((out >= 0.0) & (out <= 1.0)))
    assert bool(jnp.allclose(out, ref, atol=1e-4, rtol=1e-4))

    # Multi-step grid with a ragged tail (300 = 2*128 + 44) to exercise masking.
    B2 = 300
    obs_cm2, prev2 = make_inputs(k_prev, B2)
    out2 = ntb_forward(obs_cm2, prev2, params, tile_b=128)
    jax.block_until_ready(out2)
    ref2 = ntb_reference(obs_cm2, prev2, params)
    assert out2.shape == (B2,)
    assert bool(jnp.all(jnp.isfinite(out2)))
    assert bool(jnp.all((out2 >= 0.0) & (out2 <= 1.0)))
    assert bool(jnp.allclose(out2, ref2, atol=1e-4, rtol=1e-4))

    print("KERNEL_OK")
</pallas_src>

<mosaic_0001>
module attributes {stable_mosaic.version = 11 : i64} {
  func.func @ntb_kernel(%arg0: i32, %arg1: memref<4x128xf32, #tpu.memory_space<vmem>>, %arg2: memref<1x128xf32, #tpu.memory_space<vmem>>, %arg3: memref<32x4xf32, #tpu.memory_space<vmem>>, %arg4: memref<32x1xf32, #tpu.memory_space<vmem>>, %arg5: memref<32x32xf32, #tpu.memory_space<vmem>>, %arg6: memref<32x1xf32, #tpu.memory_space<vmem>>, %arg7: memref<2x32xf32, #tpu.memory_space<vmem>>, %arg8: memref<2x1xf32, #tpu.memory_space<vmem>>, %arg9: memref<1x128xf32, #tpu.memory_space<vmem>>) attributes {dimension_semantics = [#tpu.dimension_semantics<parallel>], iteration_bounds = array<i64: 1>, scalar_prefetch = 0 : i64, scratch_operands = 0 : i64, tpu.core_type = #tpu.core_type<tc>, window_params = [{transform_indices = @transform_0, window_bounds = array<i64: 4, 128>}, {transform_indices = @transform_1, window_bounds = array<i64: 1, 128>}, {pipeline_mode = #tpu.pipeline_mode<synchronous>, transform_indices = @transform_2, window_bounds = array<i64: 32, 4>}, {pipeline_mode = #tpu.pipeline_mode<synchronous>, transform_indices = @transform_3, window_bounds = array<i64: 32, 1>}, {pipeline_mode = #tpu.pipeline_mode<synchronous>, transform_indices = @transform_4, window_bounds = array<i64: 32, 32>}, {pipeline_mode = #tpu.pipeline_mode<synchronous>, transform_indices = @transform_5, window_bounds = array<i64: 32, 1>}, {pipeline_mode = #tpu.pipeline_mode<synchronous>, transform_indices = @transform_6, window_bounds = array<i64: 2, 32>}, {pipeline_mode = #tpu.pipeline_mode<synchronous>, transform_indices = @transform_7, window_bounds = array<i64: 2, 1>}, {transform_indices = @transform_8, window_bounds = array<i64: 1, 128>}]} {
    %c0 = arith.constant 0 : index
    %c0_0 = arith.constant 0 : index
    %0 = vector.load %arg1[%c0, %c0_0] : memref<4x128xf32, #tpu.memory_space<vmem>>, vector<4x128xf32>
    %c0_1 = arith.constant 0 : index
    %c0_2 = arith.constant 0 : index
    %1 = vector.load %arg3[%c0_1, %c0_2] : memref<32x4xf32, #tpu.memory_space<vmem>>, vector<32x4xf32>
    %cst = arith.constant dense<0.000000e+00> : vector<32x128xf32>
    %2 = tpu.matmul %1, %0, %cst {dimension_numbers = #tpu.dot_dimension_numbers<[1], [0], [0], [1], [0, 0, 1, 1], [], []>} : vector<32x4xf32>, vector<4x128xf32>, vector<32x128xf32> -> vector<32x128xf32>
    %c0_3 = arith.constant 0 : index
    %c0_4 = arith.constant 0 : index
    %3 = vector.load %arg4[%c0_3, %c0_4] : memref<32x1xf32, #tpu.memory_space<vmem>>, vector<32x1xf32>
    %4 = vector.broadcast %3 : vector<32x1xf32> to vector<32x128xf32>
    %5 = arith.addf %2, %4 : vector<32x128xf32>
    %cst_5 = arith.constant 0.000000e+00 : f32
    %6 = vector.broadcast %cst_5 : f32 to vector<32x128xf32>
    %7 = arith.maximumf %5, %6 : vector<32x128xf32>
    %c0_6 = arith.constant 0 : index
    %c0_7 = arith.constant 0 : index
    %8 = vector.load %arg5[%c0_6, %c0_7] : memref<32x32xf32, #tpu.memory_space<vmem>>, vector<32x32xf32>
    %cst_8 = arith.constant dense<0.000000e+00> : vector<32x128xf32>
    %9 = tpu.matmul %8, %7, %cst_8 {dimension_numbers = #tpu.dot_dimension_numbers<[1], [0], [0], [1], [0, 0, 1, 1], [], []>} : vector<32x32xf32>, vector<32x128xf32>, vector<32x128xf32> -> vector<32x128xf32>
    %c0_9 = arith.constant 0 : index
    %c0_10 = arith.constant 0 : index
    %10 = vector.load %arg6[%c0_9, %c0_10] : memref<32x1xf32, #tpu.memory_space<vmem>>, vector<32x1xf32>
    %11 = vector.broadcast %10 : vector<32x1xf32> to vector<32x128xf32>
    %12 = arith.addf %9, %11 : vector<32x128xf32>
    %cst_11 = arith.constant 0.000000e+00 : f32
    %13 = vector.broadcast %cst_11 : f32 to vector<32x128xf32>
    %14 = arith.maximumf %12, %13 : vector<32x128xf32>
    %c0_12 = arith.constant 0 : index
    %c0_13 = arith.constant 0 : index
    %15 = vector.load %arg7[%c0_12, %c0_13] : memref<2x32xf32, #tpu.memory_space<vmem>>, vector<2x32xf32>
    %cst_14 = arith.constant dense<0.000000e+00> : vector<2x128xf32>
    %16 = tpu.matmul %15, %14, %cst_14 {dimension_numbers = #tpu.dot_dimension_numbers<[1], [0], [0], [1], [0, 0, 1, 1], [], []>} : vector<2x32xf32>, vector<32x128xf32>, vector<2x128xf32> -> vector<2x128xf32>
    %c0_15 = arith.constant 0 : index
    %c0_16 = arith.constant 0 : index
    %17 = vector.load %arg8[%c0_15, %c0_16] : memref<2x1xf32, #tpu.memory_space<vmem>>, vector<2x1xf32>
    %18 = vector.broadcast %17 : vector<2x1xf32> to vector<2x128xf32>
    %19 = arith.addf %16, %18 : vector<2x128xf32>
    %20 = vector.extract_strided_slice %0 {offsets = [0, 0], sizes = [1, 128], strides = [1, 1]} : vector<4x128xf32> to vector<1x128xf32>
    %21 = vector.extract_strided_slice %0 {offsets = [1, 0], sizes = [1, 128], strides = [1, 1]} : vector<4x128xf32> to vector<1x128xf32>
    %22 = vector.extract_strided_slice %0 {offsets = [2, 0], sizes = [1, 128], strides = [1, 1]} : vector<4x128xf32> to vector<1x128xf32>
    %23 = vector.extract_strided_slice %0 {offsets = [3, 0], sizes = [1, 128], strides = [1, 1]} : vector<4x128xf32> to vector<1x128xf32>
    %24 = math.sqrt %21 : vector<1x128xf32>
    %25 = math.log %20 : vector<1x128xf32>
    %cst_17 = arith.constant 5.000000e-01 : f32
    %26 = vector.broadcast %cst_17 : f32 to vector<1x128xf32>
    %27 = arith.mulf %26, %22 : vector<1x128xf32>
    %28 = arith.mulf %27, %22 : vector<1x128xf32>
    %29 = arith.addf %23, %28 : vector<1x128xf32>
    %30 = arith.mulf %29, %21 : vector<1x128xf32>
    %31 = arith.addf %25, %30 : vector<1x128xf32>
    %32 = arith.mulf %22, %24 : vector<1x128xf32>
    %33 = arith.divf %31, %32 : vector<1x128xf32>
    %cst_18 = arith.constant 0.707106769 : f32
    %34 = vector.broadcast %cst_18 : f32 to vector<1x128xf32>
    %35 = arith.mulf %33, %34 : vector<1x128xf32>
    %36 = math.absf %35 : vector<1x128xf32>
    %cst_19 = arith.constant 0.327591091 : f32
    %37 = vector.broadcast %cst_19 : f32 to vector<1x128xf32>
    %38 = arith.mulf %37, %36 : vector<1x128xf32>
    %cst_20 = arith.constant 1.000000e+00 : f32
    %39 = vector.broadcast %cst_20 : f32 to vector<1x128xf32>
    %40 = arith.addf %39, %38 : vector<1x128xf32>
    %cst_21 = arith.constant 1.000000e+00 : f32
    %41 = vector.broadcast %cst_21 : f32 to vector<1x128xf32>
    %42 = arith.divf %41, %40 : vector<1x128xf32>
    %cst_22 = arith.constant 1.06140542 : f32
    %43 = vector.broadcast %cst_22 : f32 to vector<1x128xf32>
    %44 = arith.mulf %42, %43 : vector<1x128xf32>
    %cst_23 = arith.constant -1.45315206 : f32
    %45 = vector.broadcast %cst_23 : f32 to vector<1x128xf32>
    %46 = arith.addf %45, %44 : vector<1x128xf32>
    %47 = arith.mulf %42, %46 : vector<1x128xf32>
    %cst_24 = arith.constant 1.42141378 : f32
    %48 = vector.broadcast %cst_24 : f32 to vector<1x128xf32>
    %49 = arith.addf %48, %47 : vector<1x128xf32>
    %50 = arith.mulf %42, %49 : vector<1x128xf32>
    %cst_25 = arith.constant -0.284496725 : f32
    %51 = vector.broadcast %cst_25 : f32 to vector<1x128xf32>
    %52 = arith.addf %51, %50 : vector<1x128xf32>
    %53 = arith.mulf %42, %52 : vector<1x128xf32>
    %cst_26 = arith.constant 0.254829586 : f32
    %54 = vector.broadcast %cst_26 : f32 to vector<1x128xf32>
    %55 = arith.addf %54, %53 : vector<1x128xf32>
    %56 = arith.mulf %42, %55 : vector<1x128xf32>
    %cst_27 = arith.constant 0.000000e+00 : f32
    %57 = vector.broadcast %cst_27 : f32 to vector<1x128xf32>
    %58 = arith.subf %57, %36 : vector<1x128xf32>
    %59 = arith.mulf %58, %36 : vector<1x128xf32>
    %60 = math.exp %59 : vector<1x128xf32>
    %61 = arith.mulf %56, %60 : vector<1x128xf32>
    %cst_28 = arith.constant 1.000000e+00 : f32
    %62 = vector.broadcast %cst_28 : f32 to vector<1x128xf32>
    %63 = arith.subf %62, %61 : vector<1x128xf32>
    %cst_29 = arith.constant 0.000000e+00 : f32
    %64 = vector.broadcast %cst_29 : f32 to vector<1x128xf32>
    %65 = arith.cmpf olt, %35, %64 : vector<1x128xf32>
    %cst_30 = arith.constant 0.000000e+00 : f32
    %66 = vector.broadcast %cst_30 : f32 to vector<1x128xf32>
    %67 = arith.subf %66, %63 : vector<1x128xf32>
    %68 = arith.select %65, %67, %63 : vector<1x128xi1>, vector<1x128xf32>
    %cst_31 = arith.constant 0.999994993 : f32
    %69 = vector.broadcast %cst_31 : f32 to vector<1x128xf32>
    %70 = arith.mulf %69, %68 : vector<1x128xf32>
    %cst_32 = arith.constant 0.000000e+00 : f32
    %71 = vector.broadcast %cst_32 : f32 to vector<2x128xf32>
    %72 = arith.cmpf oge, %19, %71 : vector<2x128xf32>
    %cst_33 = arith.constant 0.00999999977 : f32
    %73 = vector.broadcast %cst_33 : f32 to vector<2x128xf32>
    %74 = arith.mulf %73, %19 : vector<2x128xf32>
    %75 = arith.select %72, %19, %74 : vector<2x128xi1>, vector<2x128xf32>
    %76 = math.tanh %75 : vector<2x128xf32>
    %77 = vector.extract_strided_slice %76 {offsets = [0, 0], sizes = [1, 128], strides = [1, 1]} : vector<2x128xf32> to vector<1x128xf32>
    %78 = vector.extract_strided_slice %76 {offsets = [1, 0], sizes = [1, 128], strides = [1, 1]} : vector<2x128xf32> to vector<1x128xf32>
    %79 = arith.subf %70, %77 : vector<1x128xf32>
    %80 = arith.mulf %70, %77 : vector<1x128xf32>
    %cst_34 = arith.constant 1.000000e+00 : f32
    %81 = vector.broadcast %cst_34 : f32 to vector<1x128xf32>
    %82 = arith.subf %81, %80 : vector<1x128xf32>
    %83 = arith.divf %79, %82 : vector<1x128xf32>
    %84 = arith.addf %70, %78 : vector<1x128xf32>
    %85 = arith.mulf %70, %78 : vector<1x128xf32>
    %cst_35 = arith.constant 1.000000e+00 : f32
    %86 = vector.broadcast %cst_35 : f32 to vector<1x128xf32>
    %87 = arith.addf %86, %85 : vector<1x128xf32>
    %88 = arith.divf %84, %87 : vector<1x128xf32>
    %c0_36 = arith.constant 0 : index
    %c0_37 = arith.constant 0 : index
    %89 = vector.load %arg2[%c0_36, %c0_37] : memref<1x128xf32, #tpu.memory_space<vmem>>, vector<1x128xf32>
    %cst_38 = arith.constant 2.000000e+00 : f32
    %90 = vector.broadcast %cst_38 : f32 to vector<1x128xf32>
    %91 = arith.mulf %90, %89 : vector<1x128xf32>
    %cst_39 = arith.constant 1.000000e+00 : f32
    %92 = vector.broadcast %cst_39 : f32 to vector<1x128xf32>
    %93 = arith.subf %91, %92 : vector<1x128xf32>
    %94 = arith.maximumf %93, %83 : vector<1x128xf32>
    %95 = arith.minimumf %94, %88 : vector<1x128xf32>
    %cst_40 = arith.constant 1.000000e+00 : f32
    %96 = vector.broadcast %cst_40 : f32 to vector<1x128xf32>
    %97 = arith.addf %95, %96 : vector<1x128xf32>
    %cst_41 = arith.constant 5.000000e-01 : f32
    %98 = vector.broadcast %cst_41 : f32 to vector<1x128xf32>
    %99 = arith.mulf %97, %98 : vector<1x128xf32>
    %c0_42 = arith.constant 0 : index
    %c0_43 = arith.constant 0 : index
    %100 = vector.load %arg9[%c0_42, %c0_43] : memref<1x128xf32, #tpu.memory_space<vmem>>, vector<1x128xf32>
    tpu.vector_store %arg9[%c0_42, %c0_43], %99 {strides = array<i32>} : memref<1x128xf32, #tpu.memory_space<vmem>>, vector<1x128xf32>,
    return
  }
  func.func @transform_0(%arg0: i32) -> (i32, i32) {
    %c0_i32 = arith.constant 0 : i32
    %c0_i32_0 = arith.constant 0 : i32
    return %c0_i32, %arg0 : i32, i32
  }
  func.func @transform_1(%arg0: i32) -> (i32, i32) {
    %c0_i32 = arith.constant 0 : i32
    %c0_i32_0 = arith.constant 0 : i32
    return %c0_i32, %arg0 : i32, i32
  }
  func.func @transform_2(%arg0: i32) -> (i32, i32) {
    %c0_i32 = arith.constant 0 : i32
    %c0_i32_0 = arith.constant 0 : i32
    %c0_i32_1 = arith.constant 0 : i32
    return %c0_i32, %c0_i32_0 : i32, i32
  }
  func.func @transform_3(%arg0: i32) -> (i32, i32) {
    %c0_i32 = arith.constant 0 : i32
    %c0_i32_0 = arith.constant 0 : i32
    %c0_i32_1 = arith.constant 0 : i32
    return %c0_i32, %c0_i32_0 : i32, i32
  }
  func.func @transform_4(%arg0: i32) -> (i32, i32) {
    %c0_i32 = arith.constant 0 : i32
    %c0_i32_0 = arith.constant 0 : i32
    %c0_i32_1 = arith.constant 0 : i32
    return %c0_i32, %c0_i32_0 : i32, i32
  }
  func.func @transform_5(%arg0: i32) -> (i32, i32) {
    %c0_i32 = arith.constant 0 : i32
    %c0_i32_0 = arith.constant 0 : i32
    %c0_i32_1 = arith.constant 0 : i32
    return %c0_i32, %c0_i32_0 : i32, i32
  }
  func.func @transform_6(%arg0: i32) -> (i32, i32) {
    %c0_i32 = arith.constant 0 : i32
    %c0_i32_0 = arith.constant 0 : i32
    %c0_i32_1 = arith.constant 0 : i32
    return %c0_i32, %c0_i32_0 : i32, i32
  }
  func.func @transform_7(%arg0: i32) -> (i32, i32) {
    %c0_i32 = arith.constant 0 : i32
    %c0_i32_0 = arith.constant 0 : i32
    %c0_i32_1 = arith.constant 0 : i32
    return %c0_i32, %c0_i32_0 : i32, i32
  }
  func.func @transform_8(%arg0: i32) -> (i32, i32) {
    %c0_i32 = arith.constant 0 : i32
    %c0_i32_0 = arith.constant 0 : i32
    return %c0_i32, %arg0 : i32, i32
  }
}

</mosaic_0001>

<llo_original>
// kernel: tpu_custom_call.1
$region0: #{tpu_custom_call.1}
  #allocation0 [shape = 'u32[]', space=smem, size = 0x4, offset = 0x4, fixed_abs, tag = 'smem constant byte address 0x4 - core index']
  #allocation1 [shape = 'u32[144,128]{1,0:T(1,128)}', space=vmem, size = 0x12000, scoped, tag = 'internal scratch']
  %s0 = inlined_call_operand.vmem [shape: f32[4,8], index: 0, kind: input, shape index: {}]
  %s1 = inlined_call_operand.vmem [shape: f32[1,8], index: 1, kind: input, shape index: {}]
  %s2 = inlined_call_operand.vmem [shape: f32[32,4], index: 2, kind: input, shape index: {}]
  %s3 = inlined_call_operand.vmem [shape: f32[32,1], index: 3, kind: input, shape index: {}]
  %s4 = inlined_call_operand.vmem [shape: f32[32,32], index: 4, kind: input, shape index: {}]
  %s5 = inlined_call_operand.vmem [shape: f32[32,1], index: 5, kind: input, shape index: {}]
  %s6 = inlined_call_operand.vmem [shape: f32[2,32], index: 6, kind: input, shape index: {}]
  %s7 = inlined_call_operand.vmem [shape: f32[2,1], index: 7, kind: input, shape index: {}]
  %s8 = inlined_call_operand.hbm [shape: f32[1,8], index: 8, kind: output, shape index: {}]
  %s9 = sld [smem:[#allocation0]]
  $region42: #{tpu_custom_call.1} parent=0
    _
  %s11 = ssub.s32 1, %s9
  %s12 = scalar_select 0, %s11, %s9
  $region1: #{tpu_custom_call.1} parent=0
    #allocation2 [shape = 'u8[512]{0}', space=vmem, size = 0x400, scoped, tag = 'output window, operand 0, single buffered']
    #allocation3 [shape = 's32[1]{0}', space=sflag, size = 0x4, scoped, tag = 'scoped memory for tpu_custom_call.1']
    %13 = vsyncpa [#allocation3], 0
    // Predicated region
    $region2: #{tpu_custom_call.1} parent=1 // pred_check
      _
    $region3: #{tpu_custom_call.1} parent=1 // pred_check_branch
      %15 = sbr.rel (0) target = $region5
    $region4: #{tpu_custom_call.1} parent=1 // pred_region
      _
    $region5: #{tpu_custom_call.1} parent=1 // pred_fallthru
      _
    // Predicated region
    $region6: #{tpu_custom_call.1} parent=1 // pred_check
      _
    $region7: #{tpu_custom_call.1} parent=1 // pred_check_branch
      %17 = sbr.rel (0) target = $region9
    $region8: #{tpu_custom_call.1} parent=1 // pred_region
      _
    $region9: #{tpu_custom_call.1} parent=1 // pred_fallthru
      _
    // Predicated region
    $region10: #{tpu_custom_call.1} parent=1 // pred_check
      _
    $region11: #{tpu_custom_call.1} parent=1 // pred_check_branch
      %19 = sbr.rel (0) target = $region13
    $region12: #{tpu_custom_call.1} parent=1 // pred_region
      _
    $region13: #{tpu_custom_call.1} parent=1 // pred_fallthru
      _
    // Predicated region
    $region14: #{tpu_custom_call.1} parent=1 // pred_check
      _
    $region15: #{tpu_custom_call.1} parent=1 // pred_check_branch
      %21 = sbr.rel (0) target = $region17
    $region16: #{tpu_custom_call.1} parent=1 // pred_region
      _
    $region17: #{tpu_custom_call.1} parent=1 // pred_fallthru
      _
    // Predicated region
    $region18: #{tpu_custom_call.1} parent=1 // pred_check
      _
    $region19: #{tpu_custom_call.1} parent=1 // pred_check_branch
      %23 = sbr.rel (0) target = $region21
    $region20: #{tpu_custom_call.1} parent=1 // pred_region
      _
    $region21: #{tpu_custom_call.1} parent=1 // pred_fallthru
      _
    // Predicated region
    $region22: #{tpu_custom_call.1} parent=1 // pred_check
      _
    $region23: #{tpu_custom_call.1} parent=1 // pred_check_branch
      %25 = sbr.rel (0) target = $region25
    $region24: #{tpu_custom_call.1} parent=1 // pred_region
      _
    $region25: #{tpu_custom_call.1} parent=1 // pred_fallthru
      _
    // Predicated region
    $region26: #{tpu_custom_call.1} parent=1 // pred_check
      _
    $region27: #{tpu_custom_call.1} parent=1 // pred_check_branch
      %27 = sbr.rel (0) target = $region29
    $region28: #{tpu_custom_call.1} parent=1 // pred_region
      _
    $region29: #{tpu_custom_call.1} parent=1 // pred_fallthru
      _
    // Predicated region
    $region30: #{tpu_custom_call.1} parent=1 // pred_check
      _
    $region31: #{tpu_custom_call.1} parent=1 // pred_check_branch
      %29 = sbr.rel (0) target = $region33
    $region32: #{tpu_custom_call.1} parent=1 // pred_region
      _
    $region33: #{tpu_custom_call.1} parent=1 // pred_fallthru
      _
    %v30 = vld [vmem:[%s0] sm:$0xf]
    %v31 = vld [vmem:[%s2] sm:$0xff]
    %v32 = vld [vmem:[%s2 + $0x8] sm:$0xff]
    %v33 = vld [vmem:[%s2 + $0x10] sm:$0xff]
    %v34 = vld [vmem:[%s2 + $0x18] sm:$0xff]
    %v35 = vld [vmem:[%s3] sm:$0xff]
    %v36 = vld [vmem:[%s3 + $0x8] sm:$0xff]
    %v37 = vld [vmem:[%s3 + $0x10] sm:$0xff]
    %v38 = vld [vmem:[%s3 + $0x18] sm:$0xff]
    %40 = vset.pattern.permute.xlu0 0
    %41 = vperm.xlu0 %40, %v35
    %v42 = vpop.permute.xlu0 %41
    %45 = vset.pattern.permute.xlu0 0
    %46 = vperm.xlu0 %45, %v36
    %v47 = vpop.permute.xlu0 %46
    %50 = vset.pattern.permute.xlu0 0
    %51 = vperm.xlu0 %50, %v37
    %v52 = vpop.permute.xlu0 %51
    %55 = vset.pattern.permute.xlu0 0
    %56 = vperm.xlu0 %55, %v38
    %v57 = vpop.permute.xlu0 %56
    %vm59 = vcmask 31744
    %v61 = vsel %vm59, %v31, 0
    %v64 = vsel %vm59, %v32, 0
    %v67 = vsel %vm59, %v33, 0
    %v70 = vsel %vm59, %v34, 0
    %vm72 = vcmask 1043456
    %v74 = vsel %vm72, %v30, 0
    %76 = vmatprep.subr.mxu0 0.0
    %77 = vmatpush1.msra.mxu0 %v74
    %78 = vmatprep.subr.mxu0 0.0
    %79 = vmatpush1.msra.mxu0 0.0
    %80 = vmatprep.subr.mxu0 0.0
    %81 = vmatpush1.msra.mxu0 0.0
    %82 = vmatprep.subr.mxu0 0.0
    %83 = vmatpush1.msra.mxu0 0.0
    %84 = vmatprep.subr.mxu0 0.0
    %85 = vmatpush1.msra.mxu0 0.0
    %86 = vmatprep.subr.mxu0 0.0
    %87 = vmatpush1.msra.mxu0 0.0
    %88 = vmatprep.subr.mxu0 0.0
    %89 = vmatpush1.msra.mxu0 0.0
    %90 = vmatprep.subr.mxu0 0.0
    %91 = vmatpush1.msra.mxu0 0.0
    %92 = vmatprep.subr.mxu0 0.0
    %93 = vmatpush1.msra.mxu0 0.0
    %94 = vmatprep.subr.mxu0 0.0
    %95 = vmatpush1.msra.mxu0 0.0
    %96 = vmatprep.subr.mxu0 0.0
    %97 = vmatpush1.msra.mxu0 0.0
    %98 = vmatprep.subr.mxu0 0.0
    %99 = vmatpush1.msra.mxu0 0.0
    %100 = vmatprep.subr.mxu0 0.0
    %101 = vmatpush1.msra.mxu0 0.0
    %102 = vmatprep.subr.mxu0 0.0
    %103 = vmatpush1.msra.mxu0 0.0
    %104 = vmatprep.subr.mxu0 0.0
    %105 = vmatpush1.msra.mxu0 0.0
    %106 = vmatprep.subr.mxu0 0.0
    %107 = vmatpush1.msra.mxu0 0.0
    %108 = vmatprep.subr.mxu0 0.0
    %109 = vmatpush1.msra.mxu0 0.0
    %110 = vmatprep.subr.mxu0 0.0
    %111 = vmatpush1.msra.mxu0 0.0
    %112 = vmatprep.subr.mxu0 0.0
    %113 = vmatpush1.msra.mxu0 0.0
    %114 = vmatprep.subr.mxu0 0.0
    %115 = vmatpush1.msra.mxu0 0.0
    %116 = vmatprep.subr.mxu0 0.0
    %117 = vmatpush1.msra.mxu0 0.0
    %118 = vmatprep.subr.mxu0 0.0
    %119 = vmatpush1.msra.mxu0 0.0
    %120 = vmatprep.subr.mxu0 0.0
    %121 = vmatpush1.msra.mxu0 0.0
    %122 = vmatprep.subr.mxu0 0.0
    %123 = vmatpush1.msra.mxu0 0.0
    %124 = vmatprep.subr.mxu0 0.0
    %125 = vmatpush1.msra.mxu0 0.0
    %126 = vmatprep.subr.mxu0 0.0
    %127 = vmatpush1.msra.mxu0 0.0
    %128 = vmatprep.subr.mxu0 0.0
    %129 = vmatpush1.msra.mxu0 0.0
    %130 = vmatprep.subr.mxu0 0.0
    %131 = vmatpush1.msra.mxu0 0.0
    %132 = vmatprep.subr.mxu0 0.0
    %133 = vmatpush1.msra.mxu0 0.0
    %134 = vmatprep.subr.mxu0 0.0
    %135 = vmatpush1.msra.mxu0 0.0
    %136 = vmatprep.subr.mxu0 0.0
    %137 = vmatpush1.msra.mxu0 0.0
    %138 = vmatprep.subr.mxu0 0.0
    %139 = vmatpush1.msra.mxu0 0.0
    %140 = vmatprep.mubr.f32.mxu0 0.0
    %141 = vmatmul.mubr.f32.gmra.mrb[0].mxu0 %v61
    %v142 = vpop.f32.mrb[0].mxu0
    %v143 = vadd.f32 %v42, %v142
    %v144 = vpop.f32.mrb[0].mxu0
    %145 = vmatprep.mubr.f32.mxu0 0.0
    %146 = vmatmul.mubr.f32.gmra.mrb[0].mxu0 %v64
    %v147 = vpop.f32.mrb[0].mxu0
    %v148 = vadd.f32 %v47, %v147
    %v149 = vpop.f32.mrb[0].mxu0
    %150 = vmatprep.mubr.f32.mxu0 0.0
    %151 = vmatmul.mubr.f32.gmra.mrb[0].mxu0 %v67
    %v152 = vpop.f32.mrb[0].mxu0
    %v153 = vadd.f32 %v52, %v152
    %v154 = vpop.f32.mrb[0].mxu0
    %155 = vmatprep.mubr.f32.mxu0 0.0
    %156 = vmatmul.mubr.f32.gmra.mrb[0].mxu0 %v70
    %v157 = vpop.f32.mrb[0].mxu0
    %v158 = vadd.f32 %v57, %v157
    %v159 = vpop.f32.mrb[0].mxu0
    %160 = vdwg.mxu0
    %v161 = vmax.f32 %v143, 0.0
    %v162 = vmax.f32 %v148, 0.0
    %v163 = vmax.f32 %v153, 0.0
    %v164 = vmax.f32 %v158, 0.0
    %v165 = vld [vmem:[%s4] sm:$0xff]
    %v166 = vld [vmem:[%s4 + $0x8] sm:$0xff]
    %v167 = vld [vmem:[%s4 + $0x10] sm:$0xff]
    %v168 = vld [vmem:[%s4 + $0x18] sm:$0xff]
    %v169 = vld [vmem:[%s5] sm:$0xff]
    %v170 = vld [vmem:[%s5 + $0x8] sm:$0xff]
    %v171 = vld [vmem:[%s5 + $0x10] sm:$0xff]
    %v172 = vld [vmem:[%s5 + $0x18] sm:$0xff]
    %174 = vset.pattern.permute.xlu0 0
    %175 = vperm.xlu0 %174, %v169
    %v176 = vpop.permute.xlu0 %175
    %179 = vset.pattern.permute.xlu0 0
    %180 = vperm.xlu0 %179, %v170
    %v181 = vpop.permute.xlu0 %180
    %184 = vset.pattern.permute.xlu0 0
    %185 = vperm.xlu0 %184, %v171
    %v186 = vpop.permute.xlu0 %185
    %189 = vset.pattern.permute.xlu0 0
    %190 = vperm.xlu0 %189, %v172
    %v191 = vpop.permute.xlu0 %190
    %vm193 = vcmask 261120
    %v195 = vsel %vm193, %v165, 0
    %v198 = vsel %vm193, %v166, 0
    %v201 = vsel %vm193, %v167, 0
    %v204 = vsel %vm193, %v168, 0
    %206 = vmatprep.subr.mxu0 0.0
    %207 = vmatpush1.msra.mxu0 %v161
    %208 = vmatprep.subr.mxu0 0.0
    %209 = vmatpush1.msra.mxu0 %v162
    %210 = vmatprep.subr.mxu0 0.0
    %211 = vmatpush1.msra.mxu0 %v163
    %212 = vmatprep.subr.mxu0 0.0
    %213 = vmatpush1.msra.mxu0 %v164
    %214 = vmatprep.subr.mxu0 0.0
    %215 = vmatpush1.msra.mxu0 0.0
    %216 = vmatprep.subr.mxu0 0.0
    %217 = vmatpush1.msra.mxu0 0.0
    %218 = vmatprep.subr.mxu0 0.0
    %219 = vmatpush1.msra.mxu0 0.0
    %220 = vmatprep.subr.mxu0 0.0
    %221 = vmatpush1.msra.mxu0 0.0
    %222 = vmatprep.subr.mxu0 0.0
    %223 = vmatpush1.msra.mxu0 0.0
    %224 = vmatprep.subr.mxu0 0.0
    %225 = vmatpush1.msra.mxu0 0.0
    %226 = vmatprep.subr.mxu0 0.0
    %227 = vmatpush1.msra.mxu0 0.0
    %228 = vmatprep.subr.mxu0 0.0
    %229 = vmatpush1.msra.mxu0 0.0
    %230 = vmatprep.subr.mxu0 0.0
    %231 = vmatpush1.msra.mxu0 0.0
    %232 = vmatprep.subr.mxu0 0.0
    %233 = vmatpush1.msra.mxu0 0.0
    %234 = vmatprep.subr.mxu0 0.0
    %235 = vmatpush1.msra.mxu0 0.0
    %236 = vmatprep.subr.mxu0 0.0
    %237 = vmatpush1.msra.mxu0 0.0
    %238 = vmatprep.subr.mxu0 0.0
    %239 = vmatpush1.msra.mxu0 0.0
    %240 = vmatprep.subr.mxu0 0.0
    %241 = vmatpush1.msra.mxu0 0.0
    %242 = vmatprep.subr.mxu0 0.0
    %243 = vmatpush1.msra.mxu0 0.0
    %244 = vmatprep.subr.mxu0 0.0
    %245 = vmatpush1.msra.mxu0 0.0
    %246 = vmatprep.subr.mxu0 0.0
    %247 = vmatpush1.msra.mxu0 0.0
    %248 = vmatprep.subr.mxu0 0.0
    %249 = vmatpush1.msra.mxu0 0.0
    %250 = vmatprep.subr.mxu0 0.0
    %251 = vmatpush1.msra.mxu0 0.0
    %252 = vmatprep.subr.mxu0 0.0
    %253 = vmatpush1.msra.mxu0 0.0
    %254 = vmatprep.subr.mxu0 0.0
    %255 = vmatpush1.msra.mxu0 0.0
    %256 = vmatprep.subr.mxu0 0.0
    %257 = vmatpush1.msra.mxu0 0.0
    %258 = vmatprep.subr.mxu0 0.0
    %259 = vmatpush1.msra.mxu0 0.0
    %260 = vmatprep.subr.mxu0 0.0
    %261 = vmatpush1.msra.mxu0 0.0
    %262 = vmatprep.subr.mxu0 0.0
    %263 = vmatpush1.msra.mxu0 0.0
    %264 = vmatprep.subr.mxu0 0.0
    %265 = vmatpush1.msra.mxu0 0.0
    %266 = vmatprep.subr.mxu0 0.0
    %267 = vmatpush1.msra.mxu0 0.0
    %268 = vmatprep.subr.mxu0 0.0
    %269 = vmatpush1.msra.mxu0 0.0
    %270 = vmatprep.mubr.f32.mxu0 0.0
    %271 = vmatmul.mubr.f32.gmra.mrb[0].mxu0 %v195
    %v272 = vpop.f32.mrb[0].mxu0
    %v273 = vadd.f32 %v176, %v272
    %v274 = vpop.f32.mrb[0].mxu0
    %275 = vmatprep.mubr.f32.mxu0 0.0
    %276 = vmatmul.mubr.f32.gmra.mrb[0].mxu0 %v198
    %v277 = vpop.f32.mrb[0].mxu0
    %v278 = vadd.f32 %v181, %v277
    %v279 = vpop.f32.mrb[0].mxu0
    %280 = vmatprep.mubr.f32.mxu0 0.0
    %281 = vmatmul.mubr.f32.gmra.mrb[0].mxu0 %v201
    %v282 = vpop.f32.mrb[0].mxu0
    %v283 = vadd.f32 %v186, %v282
    %v284 = vpop.f32.mrb[0].mxu0
    %285 = vmatprep.mubr.f32.mxu0 0.0
    %286 = vmatmul.mubr.f32.gmra.mrb[0].mxu0 %v204
    %v287 = vpop.f32.mrb[0].mxu0
    %v288 = vadd.f32 %v191, %v287
    %v289 = vpop.f32.mrb[0].mxu0
    %290 = vdwg.mxu0
    %v291 = vmax.f32 %v273, 0.0
    %v292 = vmax.f32 %v278, 0.0
    %v293 = vmax.f32 %v283, 0.0
    %v294 = vmax.f32 %v288, 0.0
    %v295 = vld [vmem:[%s6] sm:$0x3]
    %v296 = vld [vmem:[%s7] sm:$0x3]
    %298 = vset.pattern.permute.xlu0 0
    %299 = vperm.xlu0 %298, %v296
    %v300 = vpop.permute.xlu0 %299
    %v303 = vsel %vm193, %v295, 0
    %305 = vmatprep.subr.mxu0 0.0
    %306 = vmatpush1.msra.mxu0 %v291
    %307 = vmatprep.subr.mxu0 0.0
    %308 = vmatpush1.msra.mxu0 %v292
    %309 = vmatprep.subr.mxu0 0.0
    %310 = vmatpush1.msra.mxu0 %v293
    %311 = vmatprep.subr.mxu0 0.0
    %312 = vmatpush1.msra.mxu0 %v294
    %313 = vmatprep.subr.mxu0 0.0
    %314 = vmatpush1.msra.mxu0 0.0
    %315 = vmatprep.subr.mxu0 0.0
    %316 = vmatpush1.msra.mxu0 0.0
    %317 = vmatprep.subr.mxu0 0.0
    %318 = vmatpush1.msra.mxu0 0.0
    %319 = vmatprep.subr.mxu0 0.0
    %320 = vmatpush1.msra.mxu0 0.0
    %321 = vmatprep.subr.mxu0 0.0
    %322 = vmatpush1.msra.mxu0 0.0
    %323 = vmatprep.subr.mxu0 0.0
    %324 = vmatpush1.msra.mxu0 0.0
    %325 = vmatprep.subr.mxu0 0.0
    %326 = vmatpush1.msra.mxu0 0.0
    %327 = vmatprep.subr.mxu0 0.0
    %328 = vmatpush1.msra.mxu0 0.0
    %329 = vmatprep.subr.mxu0 0.0
    %330 = vmatpush1.msra.mxu0 0.0
    %331 = vmatprep.subr.mxu0 0.0
    %332 = vmatpush1.msra.mxu0 0.0
    %333 = vmatprep.subr.mxu0 0.0
    %334 = vmatpush1.msra.mxu0 0.0
    %335 = vmatprep.subr.mxu0 0.0
    %336 = vmatpush1.msra.mxu0 0.0
    %337 = vmatprep.subr.mxu0 0.0
    %338 = vmatpush1.msra.mxu0 0.0
    %339 = vmatprep.subr.mxu0 0.0
    %340 = vmatpush1.msra.mxu0 0.0
    %341 = vmatprep.subr.mxu0 0.0
    %342 = vmatpush1.msra.mxu0 0.0
    %343 = vmatprep.subr.mxu0 0.0
    %344 = vmatpush1.msra.mxu0 0.0
    %345 = vmatprep.subr.mxu0 0.0
    %346 = vmatpush1.msra.mxu0 0.0
    %347 = vmatprep.subr.mxu0 0.0
    %348 = vmatpush1.msra.mxu0 0.0
    %349 = vmatprep.subr.mxu0 0.0
    %350 = vmatpush1.msra.mxu0 0.0
    %351 = vmatprep.subr.mxu0 0.0
    %352 = vmatpush1.msra.mxu0 0.0
    %353 = vmatprep.subr.mxu0 0.0
    %354 = vmatpush1.msra.mxu0 0.0
    %355 = vmatprep.subr.mxu0 0.0
    %356 = vmatpush1.msra.mxu0 0.0
    %357 = vmatprep.subr.mxu0 0.0
    %358 = vmatpush1.msra.mxu0 0.0
    %359 = vmatprep.subr.mxu0 0.0
    %360 = vmatpush1.msra.mxu0 0.0
    %361 = vmatprep.subr.mxu0 0.0
    %362 = vmatpush1.msra.mxu0 0.0
    %363 = vmatprep.subr.mxu0 0.0
    %364 = vmatpush1.msra.mxu0 0.0
    %365 = vmatprep.subr.mxu0 0.0
    %366 = vmatpush1.msra.mxu0 0.0
    %367 = vmatprep.subr.mxu0 0.0
    %368 = vmatpush1.msra.mxu0 0.0
    %369 = vmatprep.mubr.f32.mxu0 0.0
    %370 = vmatmul.mubr.f32.gmra.mrb[0].mxu0 %v303
    %v371 = vpop.f32.mrb[0].mxu0
    %v372 = vadd.f32 %v300, %v371
    %v373 = vpop.f32.mrb[0].mxu0
    %374 = vdwg.mxu0
    %v375 = vrsqrt.pop %v30
    %v376 = vmul.f32 %v30, %v375
    %vm377 = vcmp.eq.f32.partialorder %v30, inf
    %v378 = vsel %vm377, %v30, %v376
    %vm379 = vcmp.eq.f32.partialorder %v30, 0.0
    %v380 = vand.u32 %v30, 2147483648
    %v381 = vsel %vm379, %v380, %v378
    %v382 = vlog2.pop %v30
    %v383 = vmul.f32 %v382, 0.6931472
    %v384 = vmul.f32 %v30, 0.5
    %v385 = vmul.f32 %v384, %v30
    %v387 = vrot.slane %v385, 7
    %v389 = vadd.f32 %v30, %v387
    %v390 = vrot.slane %v30, 6
    %v392 = vmul.f32 %v389, %v390
    %v394 = vrot.slane %v392, 3
    %v396 = vadd.f32 %v383, %v394
    %v398 = vrot.slane %v381, 7
    %v400 = vmul.f32 %v30, %v398
    %v402 = vrot.slane %v400, 2
    %v404 = vrcp.pop %v402
    %v405 = vmul.f32 %v396, %v404
    %v406 = vmul.f32 %v405, 0.70710677
    %v407 = vand.u32 2147483647, %v406
    %v408 = vmul.f32 %v407, 0.3275911
    %v409 = vadd.f32 %v408, 1.0
    %v410 = vrcp.pop %v409
    %v411 = vmul.f32 1.0, %v410
    %v412 = vmul.f32 %v411, 1.0614054
    %v413 = vadd.f32 %v412, -1.4531521
    %v414 = vmul.f32 %v411, %v413
    %v415 = vadd.f32 %v414, 1.4214138
    %v416 = vmul.f32 %v411, %v415
    %v417 = vadd.f32 %v416, -0.28449672
    %v418 = vmul.f32 %v411, %v417
    %v419 = vadd.f32 %v418, 0.2548296
    %v420 = vmul.f32 %v411, %v419
    %v421 = vsub.f32 0.0, %v407
    %v422 = vmul.f32 %v421, %v407
    %v423 = vmul.f32 %v422, 1.442695
    %v424 = vpow.pop %v423
    %v425 = vmul.f32 %v420, %v424
    %v426 = vsub.f32 1.0, %v425
    %vm427 = vcmp.lt.f32.partialorder %v406, 0.0
    %v428 = vsub.f32 0.0, %v426
    %v429 = vsel %vm427, %v428, %v426
    %v430 = vmul.f32 %v429, 0.999995
    %vm431 = vcmp.ge.f32.partialorder %v372, 0.0
    %v432 = vmul.f32 %v372, 0.01
    %v433 = vsel %vm431, %v372, %v432
    %v434 = vtanh.pop %v433
    %v435 = vsub.f32 %v430, %v434
    %v436 = vmul.f32 %v430, %v434
    %v437 = vsub.f32 1.0, %v436
    %v438 = vrcp.pop %v437
    %v439 = vmul.f32 %v435, %v438
    %v441 = vrot.slane %v434, 1
    %v443 = vadd.f32 %v430, %v441
    %v444 = vmul.f32 %v430, %v441
    %v445 = vadd.f32 %v444, 1.0
    %v446 = vrcp.pop %v445
    %v447 = vmul.f32 %v443, %v446
    %v448 = vld [vmem:[%s1] sm:$0x1]
    %v449 = vmul.f32 %v448, 2.0
    %v450 = vsub.f32 %v449, 1.0
    %v451 = vmax.f32 %v450, %v439
    %v452 = vmin.f32 %v451, %v447
    %v453 = vadd.f32 %v452, 1.0
    %v454 = vmul.f32 %v453, 0.5
    %455 = vst [vmem:[#allocation2] sm:$0x1] %v454
    // Predicated region
    $region34: #{tpu_custom_call.1} parent=1 // pred_check
      _
    $region35: #{tpu_custom_call.1} parent=1 // pred_check_branch
      %457 = sbr.rel (0) target = $region37
    $region36: #{tpu_custom_call.1} parent=1 // pred_region
      %s459 = ssub.s32 16, 16
      %460 = vsyncadd [#allocation3], %s459
      %s462 = sshll.u32 [#allocation2], 4
      %s463 = int_to_ptr.vmem [resolvable:$true] %s462
      %465 = dma.vmem_to_hbm [thread:$0]  %s463, 16, %s8, [#allocation3]
    $region37: #{tpu_custom_call.1} parent=1 // pred_fallthru
      _
    // Predicated region
    $region38: #{tpu_custom_call.1} parent=1 // pred_check
      _
    $region39: #{tpu_custom_call.1} parent=1 // pred_check_branch
      %467 = sbr.rel (0) target = $region41
    $region40: #{tpu_custom_call.1} parent=1 // pred_region
      %468 = dma.done [#allocation3], 16
    $region41: #{tpu_custom_call.1} parent=1 // pred_fallthru
      _
    %469 = vsyncpa [#allocation3], 1

</llo_original>
